<compile_context>
chip_gen: v7x
topology: tpu7x:2x2x1
jax: 0.10.0
libtpu: 0.0.40
codegen_flags: <defaults>
</compile_context>

<pallas_src>
import functools

import jax
import jax.numpy as jnp
from jax import lax
from jax.experimental import pallas as pl
from jax.experimental.pallas import tpu as pltpu

LANE = 128        # vreg lane width (last dim)
SUBLANE = 8       # vreg sublane width (second-to-last dim)
_NEG_BIG = -1e30  # padded-logit bias -> exp() underflows to exactly 0


def _round_up(n, m):
    return ((n + m - 1) // m) * m


def _cdiv(a, b):
    return -(-a // b)


def decoder_kernel(z_ref, ws_ref, bs_ref, wf_ref, bf_ref, h_ref, x_ref):
    # 4 x (Linear + Tanh); weights stacked along the leading axis, stored
    # bf16.  Matmuls: bf16 operands, f32 accumulation; tanh/bias in f32.
    def layer(i, h):
        acc = (jnp.dot(h.astype(jnp.bfloat16), ws_ref[i],
                       preferred_element_type=jnp.float32)
               + bs_ref[i])
        return jnp.tanh(acc)

    h = lax.fori_loop(0, 4, layer, z_ref[...], unroll=True)
    h_ref[...] = h.astype(h_ref.dtype)

    # fc + row-wise softmax.  Padded lanes carry a -1e30 bias -> exp == 0,
    # so the normalizer only sums the real x_dim logits.
    logits = (jnp.dot(h.astype(jnp.bfloat16), wf_ref[...],
                      preferred_element_type=jnp.float32)
              + bf_ref[...])
    m = jnp.max(logits, axis=-1, keepdims=True)
    e = jnp.exp(logits - m)
    denom = jnp.sum(e, axis=-1, keepdims=True)
    # Exact divide (VPU, off the critical path) so rows sum to 1 exactly
    # within f32; approx reciprocal was too loose for the sum-to-1 check.
    x_ref[...] = (e / denom).astype(x_ref.dtype)


def pad_params(params, z_dim, x_dim):
    """Stack the 4 hidden layers, pad features to the 128-lane width, and
    store the matmul weights in bf16 (biases stay f32)."""
    zp = _round_up(z_dim, LANE)
    xp = _round_up(x_dim, LANE)
    ws = jnp.stack([params[f"w{i + 1}"] for i in range(4)])   # (4, z, z)
    bs = jnp.stack([params[f"b{i + 1}"] for i in range(4)])   # (4, 1, z)
    ws = jnp.pad(ws, ((0, 0), (0, zp - z_dim), (0, zp - z_dim)))
    bs = jnp.pad(bs, ((0, 0), (0, 0), (0, zp - z_dim)))
    wf = jnp.pad(params["wf"], ((0, zp - z_dim), (0, xp - x_dim)))
    bf = jnp.pad(params["bf"], ((0, 0), (0, xp - x_dim)),
                 constant_values=_NEG_BIG)
    return {"ws": ws.astype(jnp.bfloat16),
            "bs": bs.astype(jnp.float32),
            "wf": wf.astype(jnp.bfloat16),
            "bf": bf.astype(jnp.float32)}


@functools.partial(jax.jit, static_argnames=("z_dim", "x_dim", "tile_b"))
def decoder_forward(z, padded, *, z_dim, x_dim, tile_b=512):
    """z: (B, z_dim) f32.  padded: output of pad_params.  Returns (h, x)."""
    B = z.shape[0]
    zp = padded["ws"].shape[-1]
    xp = padded["wf"].shape[-1]

    # Batch tile: guarantee >= 2 grid steps whenever B allows it so the
    # "parallel" axis can shard across v7x's two TensorCores and DMAs can
    # pipeline; tiny B gets a single step.  Multiple of the sublane width.
    n_steps = max(2, _cdiv(B, tile_b)) if B > SUBLANE else 1
    tb = _round_up(_cdiv(B, n_steps), SUBLANE)
    Bp = _round_up(B, tb)
    grid = (Bp // tb,)

    zf = z.astype(jnp.float32)
    if Bp != B or zp != z_dim:
        z_in = jnp.pad(zf, ((0, Bp - B), (0, zp - z_dim)))
    else:
        z_in = zf  # skip the wrapper-side pad (extra HBM traffic) when possible

    # VMEM budget: single-buffered weights + double-buffered streaming tiles.
    w_bytes = (padded["ws"].size * 2 + padded["bs"].size * 4
               + padded["wf"].size * 2 + padded["bf"].size * 4)
    stream_bytes = 2 * (tb * zp * 4 + tb * zp * 4 + tb * xp * 4)
    vmem_limit = int(min(64 << 20,
                         max(32 << 20, w_bytes + stream_bytes + (8 << 20))))

    cost = pl.CostEstimate(
        flops=2 * Bp * zp * (4 * zp + xp),
        transcendentals=Bp * (4 * zp + xp),
        bytes_accessed=4 * (2 * Bp * zp + Bp * xp) + w_bytes,
    )

    def resident(shape):
        # Constant block index -> never re-fetched; single-buffered to halve
        # the resident weight VMEM footprint (matters on v5e/v7x).
        return pl.BlockSpec(shape, lambda i: (0,) * len(shape),
                            pipeline_mode=pl.Buffered(1))

    h_p, x_p = pl.pallas_call(
        decoder_kernel,
        out_shape=(
            jax.ShapeDtypeStruct((Bp, zp), jnp.float32),
            jax.ShapeDtypeStruct((Bp, xp), jnp.float32),
        ),
        grid=grid,
        in_specs=[
            pl.BlockSpec((tb, zp), lambda i: (i, 0)),   # z batch tiles
            resident((4, zp, zp)),                      # stacked hidden W (bf16)
            resident((4, 1, zp)),                       # stacked hidden b (f32)
            resident((zp, xp)),                         # fc W (bf16)
            resident((1, xp)),                          # fc b (f32, -1e30 pad)
        ],
        out_specs=(
            pl.BlockSpec((tb, zp), lambda i: (i, 0)),
            pl.BlockSpec((tb, xp), lambda i: (i, 0)),
        ),
        compiler_params=pltpu.CompilerParams(
            dimension_semantics=("parallel",),
            vmem_limit_bytes=vmem_limit),
        cost_estimate=cost,
    )(z_in, padded["ws"], padded["bs"], padded["wf"], padded["bf"])

    h = h_p if (Bp == B and zp == z_dim) else h_p[:B, :z_dim]
    x = x_p if (Bp == B and xp == x_dim) else x_p[:B, :x_dim]
    return h, x


def init_params(key, z_dim, x_dim):
    """Deterministic init mimicking nn.Linear's U(-1/sqrt(in), 1/sqrt(in))."""
    keys = jax.random.split(key, 10)
    params = {}
    bound_z = 1.0 / jnp.sqrt(jnp.float32(z_dim))
    for i in range(4):
        params[f"w{i + 1}"] = jax.random.uniform(
            keys[2 * i], (z_dim, z_dim), jnp.float32, -bound_z, bound_z)
        params[f"b{i + 1}"] = jax.random.uniform(
            keys[2 * i + 1], (1, z_dim), jnp.float32, -bound_z, bound_z)
    params["wf"] = jax.random.uniform(
        keys[8], (z_dim, x_dim), jnp.float32, -bound_z, bound_z)
    params["bf"] = jax.random.uniform(
        keys[9], (1, x_dim), jnp.float32, -bound_z, bound_z)
    return params


if __name__ == "__main__":
    B, z_dim, x_dim = 8, 32, 16

    key = jax.random.PRNGKey(0)
    k_param, k_z = jax.random.split(key)
    params = init_params(k_param, z_dim, x_dim)
    z = jax.random.normal(k_z, (B, z_dim), dtype=jnp.float32)

    padded = pad_params(params, z_dim, x_dim)
    h, x = decoder_forward(z, padded, z_dim=z_dim, x_dim=x_dim, tile_b=512)
    jax.block_until_ready((h, x))

    # Full-precision reference in plain JAX (kernel uses bf16 matmul operands
    # with f32 accumulation, so tolerances are loosened accordingly).
    hr = z
    for i in range(4):
        hr = jnp.tanh(hr @ params[f"w{i + 1}"] + params[f"b{i + 1}"])
    logits = hr @ params["wf"] + params["bf"]
    xr = jax.nn.softmax(logits, axis=1)

    assert h.shape == (B, z_dim) and x.shape == (B, x_dim)
    assert jnp.allclose(h, hr, atol=5e-2), "h mismatch"
    assert jnp.allclose(x, xr, atol=2e-2, rtol=5e-2), "x mismatch"
    # Exact f32 divide in the kernel -> rows sum to 1 to f32 precision.
    assert jnp.allclose(jnp.sum(x, axis=1), 1.0, atol=1e-3), \
        "softmax rows must sum to ~1"

    print("KERNEL_OK")
</pallas_src>

<mosaic_0001>
module attributes {stable_mosaic.version = 11 : i64} {
  func.func @decoder_kernel(%arg0: i32, %arg1: memref<8x128xf32, #tpu.memory_space<vmem>>, %arg2: memref<4x128x128xbf16, #tpu.memory_space<vmem>>, %arg3: memref<4x1x128xf32, #tpu.memory_space<vmem>>, %arg4: memref<128x128xbf16, #tpu.memory_space<vmem>>, %arg5: memref<1x128xf32, #tpu.memory_space<vmem>>, %arg6: memref<8x128xf32, #tpu.memory_space<vmem>>, %arg7: memref<8x128xf32, #tpu.memory_space<vmem>>) attributes {dimension_semantics = [#tpu.dimension_semantics<parallel>], iteration_bounds = array<i64: 1>, scalar_prefetch = 0 : i64, scratch_operands = 0 : i64, tpu.core_type = #tpu.core_type<tc>, window_params = [{transform_indices = @transform_0, window_bounds = array<i64: 8, 128>}, {pipeline_mode = #tpu.pipeline_mode<synchronous>, transform_indices = @transform_1, window_bounds = array<i64: 4, 128, 128>}, {pipeline_mode = #tpu.pipeline_mode<synchronous>, transform_indices = @transform_2, window_bounds = array<i64: 4, 1, 128>}, {pipeline_mode = #tpu.pipeline_mode<synchronous>, transform_indices = @transform_3, window_bounds = array<i64: 128, 128>}, {pipeline_mode = #tpu.pipeline_mode<synchronous>, transform_indices = @transform_4, window_bounds = array<i64: 1, 128>}, {transform_indices = @transform_5, window_bounds = array<i64: 8, 128>}, {transform_indices = @transform_6, window_bounds = array<i64: 8, 128>}]} {
    %c0 = arith.constant 0 : index
    %c0_0 = arith.constant 0 : index
    %0 = vector.load %arg1[%c0, %c0_0] : memref<8x128xf32, #tpu.memory_space<vmem>>, vector<8x128xf32>
    %c0_i32 = arith.constant 0 : i32
    %1 = arith.truncf %0 : vector<8x128xf32> to vector<8x128xbf16>
    %2 = arith.index_cast %c0_i32 : i32 to index
    %c0_1 = arith.constant 0 : index
    %c0_2 = arith.constant 0 : index
    %3 = vector.load %arg2[%2, %c0_1, %c0_2] : memref<4x128x128xbf16, #tpu.memory_space<vmem>>, vector<1x128x128xbf16>
    %4 = vector.shape_cast %3 : vector<1x128x128xbf16> to vector<128x128xbf16>
    %cst = arith.constant dense<0.000000e+00> : vector<8x128xf32>
    %5 = tpu.matmul %1, %4, %cst {dimension_numbers = #tpu.dot_dimension_numbers<[1], [0], [0], [1], [0, 0, 1, 1], [], []>} : vector<8x128xbf16>, vector<128x128xbf16>, vector<8x128xf32> -> vector<8x128xf32>
    %6 = arith.index_cast %c0_i32 : i32 to index
    %c0_3 = arith.constant 0 : index
    %c0_4 = arith.constant 0 : index
    %7 = vector.load %arg3[%6, %c0_3, %c0_4] : memref<4x1x128xf32, #tpu.memory_space<vmem>>, vector<1x1x128xf32>
    %8 = vector.shape_cast %7 : vector<1x1x128xf32> to vector<1x128xf32>
    %9 = vector.broadcast %8 : vector<1x128xf32> to vector<8x128xf32>
    %10 = arith.addf %5, %9 : vector<8x128xf32>
    %11 = math.tanh %10 : vector<8x128xf32>
    %c1_i32 = arith.constant 1 : i32
    %12 = arith.truncf %11 : vector<8x128xf32> to vector<8x128xbf16>
    %13 = arith.index_cast %c1_i32 : i32 to index
    %c0_5 = arith.constant 0 : index
    %c0_6 = arith.constant 0 : index
    %14 = vector.load %arg2[%13, %c0_5, %c0_6] : memref<4x128x128xbf16, #tpu.memory_space<vmem>>, vector<1x128x128xbf16>
    %15 = vector.shape_cast %14 : vector<1x128x128xbf16> to vector<128x128xbf16>
    %cst_7 = arith.constant dense<0.000000e+00> : vector<8x128xf32>
    %16 = tpu.matmul %12, %15, %cst_7 {dimension_numbers = #tpu.dot_dimension_numbers<[1], [0], [0], [1], [0, 0, 1, 1], [], []>} : vector<8x128xbf16>, vector<128x128xbf16>, vector<8x128xf32> -> vector<8x128xf32>
    %17 = arith.index_cast %c1_i32 : i32 to index
    %c0_8 = arith.constant 0 : index
    %c0_9 = arith.constant 0 : index
    %18 = vector.load %arg3[%17, %c0_8, %c0_9] : memref<4x1x128xf32, #tpu.memory_space<vmem>>, vector<1x1x128xf32>
    %19 = vector.shape_cast %18 : vector<1x1x128xf32> to vector<1x128xf32>
    %20 = vector.broadcast %19 : vector<1x128xf32> to vector<8x128xf32>
    %21 = arith.addf %16, %20 : vector<8x128xf32>
    %22 = math.tanh %21 : vector<8x128xf32>
    %c2_i32 = arith.constant 2 : i32
    %23 = arith.truncf %22 : vector<8x128xf32> to vector<8x128xbf16>
    %24 = arith.index_cast %c2_i32 : i32 to index
    %c0_10 = arith.constant 0 : index
    %c0_11 = arith.constant 0 : index
    %25 = vector.load %arg2[%24, %c0_10, %c0_11] : memref<4x128x128xbf16, #tpu.memory_space<vmem>>, vector<1x128x128xbf16>
    %26 = vector.shape_cast %25 : vector<1x128x128xbf16> to vector<128x128xbf16>
    %cst_12 = arith.constant dense<0.000000e+00> : vector<8x128xf32>
    %27 = tpu.matmul %23, %26, %cst_12 {dimension_numbers = #tpu.dot_dimension_numbers<[1], [0], [0], [1], [0, 0, 1, 1], [], []>} : vector<8x128xbf16>, vector<128x128xbf16>, vector<8x128xf32> -> vector<8x128xf32>
    %28 = arith.index_cast %c2_i32 : i32 to index
    %c0_13 = arith.constant 0 : index
    %c0_14 = arith.constant 0 : index
    %29 = vector.load %arg3[%28, %c0_13, %c0_14] : memref<4x1x128xf32, #tpu.memory_space<vmem>>, vector<1x1x128xf32>
    %30 = vector.shape_cast %29 : vector<1x1x128xf32> to vector<1x128xf32>
    %31 = vector.broadcast %30 : vector<1x128xf32> to vector<8x128xf32>
    %32 = arith.addf %27, %31 : vector<8x128xf32>
    %33 = math.tanh %32 : vector<8x128xf32>
    %c3_i32 = arith.constant 3 : i32
    %34 = arith.truncf %33 : vector<8x128xf32> to vector<8x128xbf16>
    %35 = arith.index_cast %c3_i32 : i32 to index
    %c0_15 = arith.constant 0 : index
    %c0_16 = arith.constant 0 : index
    %36 = vector.load %arg2[%35, %c0_15, %c0_16] : memref<4x128x128xbf16, #tpu.memory_space<vmem>>, vector<1x128x128xbf16>
    %37 = vector.shape_cast %36 : vector<1x128x128xbf16> to vector<128x128xbf16>
    %cst_17 = arith.constant dense<0.000000e+00> : vector<8x128xf32>
    %38 = tpu.matmul %34, %37, %cst_17 {dimension_numbers = #tpu.dot_dimension_numbers<[1], [0], [0], [1], [0, 0, 1, 1], [], []>} : vector<8x128xbf16>, vector<128x128xbf16>, vector<8x128xf32> -> vector<8x128xf32>
    %39 = arith.index_cast %c3_i32 : i32 to index
    %c0_18 = arith.constant 0 : index
    %c0_19 = arith.constant 0 : index
    %40 = vector.load %arg3[%39, %c0_18, %c0_19] : memref<4x1x128xf32, #tpu.memory_space<vmem>>, vector<1x1x128xf32>
    %41 = vector.shape_cast %40 : vector<1x1x128xf32> to vector<1x128xf32>
    %42 = vector.broadcast %41 : vector<1x128xf32> to vector<8x128xf32>
    %43 = arith.addf %38, %42 : vector<8x128xf32>
    %44 = math.tanh %43 : vector<8x128xf32>
    %c4_i32 = arith.constant 4 : i32
    %c0_20 = arith.constant 0 : index
    %c0_21 = arith.constant 0 : index
    %45 = vector.load %arg6[%c0_20, %c0_21] : memref<8x128xf32, #tpu.memory_space<vmem>>, vector<8x128xf32>
    tpu.vector_store %arg6[%c0_20, %c0_21], %44 {strides = array<i32>} : memref<8x128xf32, #tpu.memory_space<vmem>>, vector<8x128xf32>,
    %46 = arith.truncf %44 : vector<8x128xf32> to vector<8x128xbf16>
    %c0_22 = arith.constant 0 : index
    %c0_23 = arith.constant 0 : index
    %47 = vector.load %arg4[%c0_22, %c0_23] : memref<128x128xbf16, #tpu.memory_space<vmem>>, vector<128x128xbf16>
    %cst_24 = arith.constant dense<0.000000e+00> : vector<8x128xf32>
    %48 = tpu.matmul %46, %47, %cst_24 {dimension_numbers = #tpu.dot_dimension_numbers<[1], [0], [0], [1], [0, 0, 1, 1], [], []>} : vector<8x128xbf16>, vector<128x128xbf16>, vector<8x128xf32> -> vector<8x128xf32>
    %c0_25 = arith.constant 0 : index
    %c0_26 = arith.constant 0 : index
    %49 = vector.load %arg5[%c0_25, %c0_26] : memref<1x128xf32, #tpu.memory_space<vmem>>, vector<1x128xf32>
    %50 = vector.broadcast %49 : vector<1x128xf32> to vector<8x128xf32>
    %51 = arith.addf %48, %50 : vector<8x128xf32>
    %cst_27 = arith.constant dense<0xFF800000> : vector<8xf32>
    %52 = vector.multi_reduction <maximumf>, %51, %cst_27 [1] : vector<8x128xf32> to vector<8xf32>
    %53 = vector.shape_cast %52 : vector<8xf32> to vector<8x1xf32>
    %54 = vector.broadcast %53 : vector<8x1xf32> to vector<8x128xf32>
    %55 = arith.subf %51, %54 : vector<8x128xf32>
    %56 = math.exp %55 : vector<8x128xf32>
    %cst_28 = arith.constant dense<0.000000e+00> : vector<8xf32>
    %57 = vector.multi_reduction <add>, %56, %cst_28 [1] : vector<8x128xf32> to vector<8xf32>
    %58 = vector.shape_cast %57 : vector<8xf32> to vector<8x1xf32>
    %59 = vector.broadcast %58 : vector<8x1xf32> to vector<8x128xf32>
    %60 = arith.divf %56, %59 : vector<8x128xf32>
    %c0_29 = arith.constant 0 : index
    %c0_30 = arith.constant 0 : index
    %61 = vector.load %arg7[%c0_29, %c0_30] : memref<8x128xf32, #tpu.memory_space<vmem>>, vector<8x128xf32>
    tpu.vector_store %arg7[%c0_29, %c0_30], %60 {strides = array<i32>} : memref<8x128xf32, #tpu.memory_space<vmem>>, vector<8x128xf32>,
    return
  }
  func.func @transform_0(%arg0: i32) -> (i32, i32) {
    %c0_i32 = arith.constant 0 : i32
    %c0_i32_0 = arith.constant 0 : i32
    return %arg0, %c0_i32 : i32, i32
  }
  func.func @transform_1(%arg0: i32) -> (i32, i32, i32) {
    %c0_i32 = arith.constant 0 : i32
    %c0_i32_0 = arith.constant 0 : i32
    %c0_i32_1 = arith.constant 0 : i32
    %c0_i32_2 = arith.constant 0 : i32
    return %c0_i32, %c0_i32_0, %c0_i32_1 : i32, i32, i32
  }
  func.func @transform_2(%arg0: i32) -> (i32, i32, i32) {
    %c0_i32 = arith.constant 0 : i32
    %c0_i32_0 = arith.constant 0 : i32
    %c0_i32_1 = arith.constant 0 : i32
    %c0_i32_2 = arith.constant 0 : i32
    return %c0_i32, %c0_i32_0, %c0_i32_1 : i32, i32, i32
  }
  func.func @transform_3(%arg0: i32) -> (i32, i32) {
    %c0_i32 = arith.constant 0 : i32
    %c0_i32_0 = arith.constant 0 : i32
    %c0_i32_1 = arith.constant 0 : i32
    return %c0_i32, %c0_i32_0 : i32, i32
  }
  func.func @transform_4(%arg0: i32) -> (i32, i32) {
    %c0_i32 = arith.constant 0 : i32
    %c0_i32_0 = arith.constant 0 : i32
    %c0_i32_1 = arith.constant 0 : i32
    return %c0_i32, %c0_i32_0 : i32, i32
  }
  func.func @transform_5(%arg0: i32) -> (i32, i32) {
    %c0_i32 = arith.constant 0 : i32
    %c0_i32_0 = arith.constant 0 : i32
    return %arg0, %c0_i32 : i32, i32
  }
  func.func @transform_6(%arg0: i32) -> (i32, i32) {
    %c0_i32 = arith.constant 0 : i32
    %c0_i32_0 = arith.constant 0 : i32
    return %arg0, %c0_i32 : i32, i32
  }
}

</mosaic_0001>

<llo_original>
// kernel: decoder_forward.1
$region0: #{decoder_forward.1}
  #allocation0 [shape = 'u32[]', space=smem, size = 0x4, offset = 0x4, fixed_abs, tag = 'smem constant byte address 0x4 - core index']
  #allocation1 [shape = 'u32[144,128]{1,0:T(1,128)}', space=vmem, size = 0x12000, scoped, tag = 'internal scratch']
  %s0 = inlined_call_operand.vmem [shape: f32[8,128], index: 0, kind: input, shape index: {}]
  %s1 = inlined_call_operand.hbm [shape: bf16[4,128,128], index: 1, kind: input, shape index: {}]
  %s2 = inlined_call_operand.vmem [shape: f32[4,1,128], index: 2, kind: input, shape index: {}]
  %s3 = inlined_call_operand.hbm [shape: bf16[128,128], index: 3, kind: input, shape index: {}]
  %s4 = inlined_call_operand.vmem [shape: f32[1,128], index: 4, kind: input, shape index: {}]
  %s5 = inlined_call_operand.hbm [shape: f32[8,128], index: 5, kind: output, shape index: {0}]
  %s6 = inlined_call_operand.hbm [shape: f32[8,128], index: 6, kind: output, shape index: {1}]
  %7 = xla_tuple %s5, %s6
  %s8 = sld [smem:[#allocation0]]
  $region46: #{decoder_forward.1} parent=0
    _
  %s10 = ssub.s32 1, %s8
  %s11 = scalar_select 0, %s10, %s8
  $region1: #{decoder_forward.1} parent=0
    #allocation2 [shape = 'u8[131072]{0}', space=vmem, size = 0x20000, scoped, tag = 'input window, operand 1, single buffered']
    #allocation3 [shape = 's32[1]{0}', space=sflag, size = 0x4, scoped, tag = 'scoped memory for decoder_forward.1']
    #allocation4 [shape = 's32[1]{0}', space=sflag, size = 0x4, scoped, tag = 'scoped memory for decoder_forward.1']
    #allocation5 [shape = 'u8[32768]{0}', space=vmem, size = 0x8000, scoped, tag = 'input window, operand 3, single buffered']
    #allocation6 [shape = 's32[1]{0}', space=sflag, size = 0x4, scoped, tag = 'scoped memory for decoder_forward.1']
    #allocation7 [shape = 'u8[4096]{0}', space=vmem, size = 0x1000, scoped, tag = 'output window, operand 0, single buffered']
    #allocation8 [shape = 'u8[4096]{0}', space=vmem, size = 0x1000, scoped, tag = 'output window, operand 1, single buffered']
    #allocation9 [shape = 's32[1]{0}', space=sflag, size = 0x4, scoped, tag = 'scoped memory for decoder_forward.1']
    %12 = vsyncpa [#allocation3], 0
    %13 = vsyncpa [#allocation6], 0
    %14 = vsyncpa [#allocation4], 0
    %15 = vsyncpa [#allocation9], 0
    // Predicated region
    $region2: #{decoder_forward.1} parent=1 // pred_check
      _
    $region3: #{decoder_forward.1} parent=1 // pred_check_branch
      %17 = sbr.rel (0) target = $region5
    $region4: #{decoder_forward.1} parent=1 // pred_region
      _
    $region5: #{decoder_forward.1} parent=1 // pred_fallthru
      _
    // Predicated region
    $region6: #{decoder_forward.1} parent=1 // pred_check
      _
    $region7: #{decoder_forward.1} parent=1 // pred_check_branch
      %19 = sbr.rel (0) target = $region9
    $region8: #{decoder_forward.1} parent=1 // pred_region
      %s21 = ssub.s32 4096, 4096
      %22 = vsyncadd [#allocation3], %s21
      %s23 = sshll.u32 [#allocation2], 4
      %s24 = int_to_ptr.vmem [resolvable:$true] %s23
      %29 = dma.hbm_to_vmem [thread:$0]  %s1, 4096, %s24, [#allocation3], 64, 64, 4
    $region9: #{decoder_forward.1} parent=1 // pred_fallthru
      _
    // Predicated region
    $region10: #{decoder_forward.1} parent=1 // pred_check
      _
    $region11: #{decoder_forward.1} parent=1 // pred_check_branch
      %31 = sbr.rel (0) target = $region13
    $region12: #{decoder_forward.1} parent=1 // pred_region
      _
    $region13: #{decoder_forward.1} parent=1 // pred_fallthru
      _
    // Predicated region
    $region14: #{decoder_forward.1} parent=1 // pred_check
      _
    $region15: #{decoder_forward.1} parent=1 // pred_check_branch
      %33 = sbr.rel (0) target = $region17
    $region16: #{decoder_forward.1} parent=1 // pred_region
      %s35 = ssub.s32 1024, 1024
      %36 = vsyncadd [#allocation6], %s35
      %s37 = sshll.u32 [#allocation5], 4
      %s38 = int_to_ptr.vmem [resolvable:$true] %s37
      %43 = dma.hbm_to_vmem [thread:$0]  %s3, 1024, %s38, [#allocation6], 64, 64, 4
    $region17: #{decoder_forward.1} parent=1 // pred_fallthru
      _
    // Predicated region
    $region18: #{decoder_forward.1} parent=1 // pred_check
      _
    $region19: #{decoder_forward.1} parent=1 // pred_check_branch
      %45 = sbr.rel (0) target = $region21
    $region20: #{decoder_forward.1} parent=1 // pred_region
      _
    $region21: #{decoder_forward.1} parent=1 // pred_fallthru
      _
    // Predicated region
    $region22: #{decoder_forward.1} parent=1 // pred_check
      _
    $region23: #{decoder_forward.1} parent=1 // pred_check_branch
      %47 = sbr.rel (0) target = $region25
    $region24: #{decoder_forward.1} parent=1 // pred_region
      %48 = dma.done [#allocation3], 4096
    $region25: #{decoder_forward.1} parent=1 // pred_fallthru
      _
    // Predicated region
    $region26: #{decoder_forward.1} parent=1 // pred_check
      _
    $region27: #{decoder_forward.1} parent=1 // pred_check_branch
      %50 = sbr.rel (0) target = $region29
    $region28: #{decoder_forward.1} parent=1 // pred_region
      %51 = dma.done [#allocation6], 1024
    $region29: #{decoder_forward.1} parent=1 // pred_fallthru
      _
    %v53 = vld [vmem:[%s0] sm:$0xff]
    %v54 = vpack.c.bf16 %v53, %v53
    %v55 = vld [vmem:[#allocation2] sm:$0xf]
    %v56 = vld [vmem:[#allocation2 + $0x4] sm:$0xf]
    %v57 = vld [vmem:[#allocation2 + $0x8] sm:$0xf]
    %v58 = vld [vmem:[#allocation2 + $0xc] sm:$0xf]
    %v59 = vld [vmem:[#allocation2 + $0x10] sm:$0xf]
    %v60 = vld [vmem:[#allocation2 + $0x14] sm:$0xf]
    %v61 = vld [vmem:[#allocation2 + $0x18] sm:$0xf]
    %v62 = vld [vmem:[#allocation2 + $0x1c] sm:$0xf]
    %v63 = vld [vmem:[#allocation2 + $0x20] sm:$0xf]
    %v64 = vld [vmem:[#allocation2 + $0x24] sm:$0xf]
    %v65 = vld [vmem:[#allocation2 + $0x28] sm:$0xf]
    %v66 = vld [vmem:[#allocation2 + $0x2c] sm:$0xf]
    %v67 = vld [vmem:[#allocation2 + $0x30] sm:$0xf]
    %v68 = vld [vmem:[#allocation2 + $0x34] sm:$0xf]
    %v69 = vld [vmem:[#allocation2 + $0x38] sm:$0xf]
    %v70 = vld [vmem:[#allocation2 + $0x3c] sm:$0xf]
    %v71 = vld [vmem:[%s2] sm:$0x1]
    %v73 = vlaneseq
    %v74 = vshrl.u32 %v73, 7
    %v75 = vsub.s32 0, %v74
    %v76 = vrot.slane %v71, %v75
    %v94 = vunpack.c.l.b16 %v55
    %v95 = vunpack.c.l.b16 %v56
    %v96 = vunpack.c.l.b16 %v57
    %v97 = vunpack.c.l.b16 %v58
    %v98 = vunpack.c.l.b16 %v59
    %v99 = vunpack.c.l.b16 %v60
    %v100 = vunpack.c.l.b16 %v61
    %v101 = vunpack.c.l.b16 %v62
    %v102 = vunpack.c.l.b16 %v63
    %v103 = vunpack.c.l.b16 %v64
    %v104 = vunpack.c.l.b16 %v65
    %v105 = vunpack.c.l.b16 %v66
    %v106 = vunpack.c.l.b16 %v67
    %v107 = vunpack.c.l.b16 %v68
    %v108 = vunpack.c.l.b16 %v69
    %v109 = vunpack.c.l.b16 %v70
    %v110 = vpack.c.b16 %v95, %v94
    %v111 = vpack.c.b16 %v97, %v96
    %v112 = vpack.c.b16 %v99, %v98
    %v113 = vpack.c.b16 %v101, %v100
    %v114 = vpack.c.b16 %v103, %v102
    %v115 = vpack.c.b16 %v105, %v104
    %v116 = vpack.c.b16 %v107, %v106
    %v117 = vpack.c.b16 %v109, %v108
    %126 = vmatprep.subr.bf16.mxu0 0
    %127 = vmatpush1.bf16.msra.mxu0 %v110
    %128 = vmatprep.subr.bf16.mxu0 0
    %129 = vmatpush1.bf16.msra.mxu0 %v111
    %130 = vmatprep.subr.bf16.mxu0 0
    %131 = vmatpush1.bf16.msra.mxu0 %v112
    %132 = vmatprep.subr.bf16.mxu0 0
    %133 = vmatpush1.bf16.msra.mxu0 %v113
    %134 = vmatprep.subr.bf16.mxu0 0
    %135 = vmatpush1.bf16.msra.mxu0 %v114
    %136 = vmatprep.subr.bf16.mxu0 0
    %137 = vmatpush1.bf16.msra.mxu0 %v115
    %138 = vmatprep.subr.bf16.mxu0 0
    %139 = vmatpush1.bf16.msra.mxu0 %v116
    %140 = vmatprep.subr.bf16.mxu0 0
    %141 = vmatpush1.bf16.msra.mxu0 %v117
    %142 = vmatprep.subr.bf16.mxu0 0
    %143 = vmatpush1.bf16.msra.mxu0 0
    %144 = vmatprep.subr.bf16.mxu0 0
    %145 = vmatpush1.bf16.msra.mxu0 0
    %146 = vmatprep.subr.bf16.mxu0 0
    %147 = vmatpush1.bf16.msra.mxu0 0
    %148 = vmatprep.subr.bf16.mxu0 0
    %149 = vmatpush1.bf16.msra.mxu0 0
    %150 = vmatprep.subr.bf16.mxu0 0
    %151 = vmatpush1.bf16.msra.mxu0 0
    %152 = vmatprep.subr.bf16.mxu0 0
    %153 = vmatpush1.bf16.msra.mxu0 0
    %154 = vmatprep.subr.bf16.mxu0 0
    %155 = vmatpush1.bf16.msra.mxu0 0
    %156 = vmatprep.subr.bf16.mxu0 0
    %157 = vmatpush1.bf16.msra.mxu0 0
    %158 = vmatprep.mubr.bf16.mxu0 0
    %159 = vmatmul.mubr.bf16.gmra.mrb[0].mxu0 %v54
    %v160 = vpop.f32.mrb[0].mxu0
    %v161 = vadd.f32 %v76, %v160
    %v162 = vpop.f32.mrb[0].mxu0
    %v163 = vpop.f32.mrb[0].mxu0
    %v164 = vpop.f32.mrb[0].mxu0
    %165 = vdwg.mxu0
    %v166 = vtanh.pop %v161
    %v167 = vpack.c.bf16 %v166, %v166
    %s168 = scalar_lea.vmem [#allocation2], 64
    %v169 = vld [vmem:[%s168] sm:$0xf]
    %v170 = vld [vmem:[%s168 + $0x4] sm:$0xf]
    %v171 = vld [vmem:[%s168 + $0x8] sm:$0xf]
    %v172 = vld [vmem:[%s168 + $0xc] sm:$0xf]
    %v173 = vld [vmem:[%s168 + $0x10] sm:$0xf]
    %v174 = vld [vmem:[%s168 + $0x14] sm:$0xf]
    %v175 = vld [vmem:[%s168 + $0x18] sm:$0xf]
    %v176 = vld [vmem:[%s168 + $0x1c] sm:$0xf]
    %v177 = vld [vmem:[%s168 + $0x20] sm:$0xf]
    %v178 = vld [vmem:[%s168 + $0x24] sm:$0xf]
    %v179 = vld [vmem:[%s168 + $0x28] sm:$0xf]
    %v180 = vld [vmem:[%s168 + $0x2c] sm:$0xf]
    %v181 = vld [vmem:[%s168 + $0x30] sm:$0xf]
    %v182 = vld [vmem:[%s168 + $0x34] sm:$0xf]
    %v183 = vld [vmem:[%s168 + $0x38] sm:$0xf]
    %v184 = vld [vmem:[%s168 + $0x3c] sm:$0xf]
    %s185 = scalar_lea.vmem %s2, 1
    %v186 = vld [vmem:[%s185] sm:$0x1]
    %v188 = vlaneseq
    %v189 = vshrl.u32 %v188, 7
    %v190 = vsub.s32 0, %v189
    %v191 = vrot.slane %v186, %v190
    %v209 = vunpack.c.l.b16 %v169
    %v210 = vunpack.c.l.b16 %v170
    %v211 = vunpack.c.l.b16 %v171
    %v212 = vunpack.c.l.b16 %v172
    %v213 = vunpack.c.l.b16 %v173
    %v214 = vunpack.c.l.b16 %v174
    %v215 = vunpack.c.l.b16 %v175
    %v216 = vunpack.c.l.b16 %v176
    %v217 = vunpack.c.l.b16 %v177
    %v218 = vunpack.c.l.b16 %v178
    %v219 = vunpack.c.l.b16 %v179
    %v220 = vunpack.c.l.b16 %v180
    %v221 = vunpack.c.l.b16 %v181
    %v222 = vunpack.c.l.b16 %v182
    %v223 = vunpack.c.l.b16 %v183
    %v224 = vunpack.c.l.b16 %v184
    %v225 = vpack.c.b16 %v210, %v209
    %v226 = vpack.c.b16 %v212, %v211
    %v227 = vpack.c.b16 %v214, %v213
    %v228 = vpack.c.b16 %v216, %v215
    %v229 = vpack.c.b16 %v218, %v217
    %v230 = vpack.c.b16 %v220, %v219
    %v231 = vpack.c.b16 %v222, %v221
    %v232 = vpack.c.b16 %v224, %v223
    %241 = vmatprep.subr.bf16.mxu0 0
    %242 = vmatpush1.bf16.msra.mxu0 %v225
    %243 = vmatprep.subr.bf16.mxu0 0
    %244 = vmatpush1.bf16.msra.mxu0 %v226
    %245 = vmatprep.subr.bf16.mxu0 0
    %246 = vmatpush1.bf16.msra.mxu0 %v227
    %247 = vmatprep.subr.bf16.mxu0 0
    %248 = vmatpush1.bf16.msra.mxu0 %v228
    %249 = vmatprep.subr.bf16.mxu0 0
    %250 = vmatpush1.bf16.msra.mxu0 %v229
    %251 = vmatprep.subr.bf16.mxu0 0
    %252 = vmatpush1.bf16.msra.mxu0 %v230
    %253 = vmatprep.subr.bf16.mxu0 0
    %254 = vmatpush1.bf16.msra.mxu0 %v231
    %255 = vmatprep.subr.bf16.mxu0 0
    %256 = vmatpush1.bf16.msra.mxu0 %v232
    %257 = vmatprep.subr.bf16.mxu0 0
    %258 = vmatpush1.bf16.msra.mxu0 0
    %259 = vmatprep.subr.bf16.mxu0 0
    %260 = vmatpush1.bf16.msra.mxu0 0
    %261 = vmatprep.subr.bf16.mxu0 0
    %262 = vmatpush1.bf16.msra.mxu0 0
    %263 = vmatprep.subr.bf16.mxu0 0
    %264 = vmatpush1.bf16.msra.mxu0 0
    %265 = vmatprep.subr.bf16.mxu0 0
    %266 = vmatpush1.bf16.msra.mxu0 0
    %267 = vmatprep.subr.bf16.mxu0 0
    %268 = vmatpush1.bf16.msra.mxu0 0
    %269 = vmatprep.subr.bf16.mxu0 0
    %270 = vmatpush1.bf16.msra.mxu0 0
    %271 = vmatprep.subr.bf16.mxu0 0
    %272 = vmatpush1.bf16.msra.mxu0 0
    %273 = vmatprep.mubr.bf16.mxu0 0
    %274 = vmatmul.mubr.bf16.gmra.mrb[0].mxu0 %v167
    %v275 = vpop.f32.mrb[0].mxu0
    %v276 = vadd.f32 %v191, %v275
    %v277 = vpop.f32.mrb[0].mxu0
    %v278 = vpop.f32.mrb[0].mxu0
    %v279 = vpop.f32.mrb[0].mxu0
    %280 = vdwg.mxu0
    %v281 = vtanh.pop %v276
    %v282 = vpack.c.bf16 %v281, %v281
    %s283 = scalar_lea.vmem [#allocation2], 128
    %v284 = vld [vmem:[%s283] sm:$0xf]
    %v285 = vld [vmem:[%s283 + $0x4] sm:$0xf]
    %v286 = vld [vmem:[%s283 + $0x8] sm:$0xf]
    %v287 = vld [vmem:[%s283 + $0xc] sm:$0xf]
    %v288 = vld [vmem:[%s283 + $0x10] sm:$0xf]
    %v289 = vld [vmem:[%s283 + $0x14] sm:$0xf]
    %v290 = vld [vmem:[%s283 + $0x18] sm:$0xf]
    %v291 = vld [vmem:[%s283 + $0x1c] sm:$0xf]
    %v292 = vld [vmem:[%s283 + $0x20] sm:$0xf]
    %v293 = vld [vmem:[%s283 + $0x24] sm:$0xf]
    %v294 = vld [vmem:[%s283 + $0x28] sm:$0xf]
    %v295 = vld [vmem:[%s283 + $0x2c] sm:$0xf]
    %v296 = vld [vmem:[%s283 + $0x30] sm:$0xf]
    %v297 = vld [vmem:[%s283 + $0x34] sm:$0xf]
    %v298 = vld [vmem:[%s283 + $0x38] sm:$0xf]
    %v299 = vld [vmem:[%s283 + $0x3c] sm:$0xf]
    %s300 = scalar_lea.vmem %s2, 2
    %v301 = vld [vmem:[%s300] sm:$0x1]
    %v303 = vlaneseq
    %v304 = vshrl.u32 %v303, 7
    %v305 = vsub.s32 0, %v304
    %v306 = vrot.slane %v301, %v305
    %v324 = vunpack.c.l.b16 %v284
    %v325 = vunpack.c.l.b16 %v285
    %v326 = vunpack.c.l.b16 %v286
    %v327 = vunpack.c.l.b16 %v287
    %v328 = vunpack.c.l.b16 %v288
    %v329 = vunpack.c.l.b16 %v289
    %v330 = vunpack.c.l.b16 %v290
    %v331 = vunpack.c.l.b16 %v291
    %v332 = vunpack.c.l.b16 %v292
    %v333 = vunpack.c.l.b16 %v293
    %v334 = vunpack.c.l.b16 %v294
    %v335 = vunpack.c.l.b16 %v295
    %v336 = vunpack.c.l.b16 %v296
    %v337 = vunpack.c.l.b16 %v297
    %v338 = vunpack.c.l.b16 %v298
    %v339 = vunpack.c.l.b16 %v299
    %v340 = vpack.c.b16 %v325, %v324
    %v341 = vpack.c.b16 %v327, %v326
    %v342 = vpack.c.b16 %v329, %v328
    %v343 = vpack.c.b16 %v331, %v330
    %v344 = vpack.c.b16 %v333, %v332
    %v345 = vpack.c.b16 %v335, %v334
    %v346 = vpack.c.b16 %v337, %v336
    %v347 = vpack.c.b16 %v339, %v338
    %356 = vmatprep.subr.bf16.mxu0 0
    %357 = vmatpush1.bf16.msra.mxu0 %v340
    %358 = vmatprep.subr.bf16.mxu0 0
    %359 = vmatpush1.bf16.msra.mxu0 %v341
    %360 = vmatprep.subr.bf16.mxu0 0
    %361 = vmatpush1.bf16.msra.mxu0 %v342
    %362 = vmatprep.subr.bf16.mxu0 0
    %363 = vmatpush1.bf16.msra.mxu0 %v343
    %364 = vmatprep.subr.bf16.mxu0 0
    %365 = vmatpush1.bf16.msra.mxu0 %v344
    %366 = vmatprep.subr.bf16.mxu0 0
    %367 = vmatpush1.bf16.msra.mxu0 %v345
    %368 = vmatprep.subr.bf16.mxu0 0
    %369 = vmatpush1.bf16.msra.mxu0 %v346
    %370 = vmatprep.subr.bf16.mxu0 0
    %371 = vmatpush1.bf16.msra.mxu0 %v347
    %372 = vmatprep.subr.bf16.mxu0 0
    %373 = vmatpush1.bf16.msra.mxu0 0
    %374 = vmatprep.subr.bf16.mxu0 0
    %375 = vmatpush1.bf16.msra.mxu0 0
    %376 = vmatprep.subr.bf16.mxu0 0
    %377 = vmatpush1.bf16.msra.mxu0 0
    %378 = vmatprep.subr.bf16.mxu0 0
    %379 = vmatpush1.bf16.msra.mxu0 0
    %380 = vmatprep.subr.bf16.mxu0 0
    %381 = vmatpush1.bf16.msra.mxu0 0
    %382 = vmatprep.subr.bf16.mxu0 0
    %383 = vmatpush1.bf16.msra.mxu0 0
    %384 = vmatprep.subr.bf16.mxu0 0
    %385 = vmatpush1.bf16.msra.mxu0 0
    %386 = vmatprep.subr.bf16.mxu0 0
    %387 = vmatpush1.bf16.msra.mxu0 0
    %388 = vmatprep.mubr.bf16.mxu0 0
    %389 = vmatmul.mubr.bf16.gmra.mrb[0].mxu0 %v282
    %v390 = vpop.f32.mrb[0].mxu0
    %v391 = vadd.f32 %v306, %v390
    %v392 = vpop.f32.mrb[0].mxu0
    %v393 = vpop.f32.mrb[0].mxu0
    %v394 = vpop.f32.mrb[0].mxu0
    %395 = vdwg.mxu0
    %v396 = vtanh.pop %v391
    %v397 = vpack.c.bf16 %v396, %v396
    %s398 = scalar_lea.vmem [#allocation2], 192
    %v399 = vld [vmem:[%s398] sm:$0xf]
    %v400 = vld [vmem:[%s398 + $0x4] sm:$0xf]
    %v401 = vld [vmem:[%s398 + $0x8] sm:$0xf]
    %v402 = vld [vmem:[%s398 + $0xc] sm:$0xf]
    %v403 = vld [vmem:[%s398 + $0x10] sm:$0xf]
    %v404 = vld [vmem:[%s398 + $0x14] sm:$0xf]
    %v405 = vld [vmem:[%s398 + $0x18] sm:$0xf]
    %v406 = vld [vmem:[%s398 + $0x1c] sm:$0xf]
    %v407 = vld [vmem:[%s398 + $0x20] sm:$0xf]
    %v408 = vld [vmem:[%s398 + $0x24] sm:$0xf]
    %v409 = vld [vmem:[%s398 + $0x28] sm:$0xf]
    %v410 = vld [vmem:[%s398 + $0x2c] sm:$0xf]
    %v411 = vld [vmem:[%s398 + $0x30] sm:$0xf]
    %v412 = vld [vmem:[%s398 + $0x34] sm:$0xf]
    %v413 = vld [vmem:[%s398 + $0x38] sm:$0xf]
    %v414 = vld [vmem:[%s398 + $0x3c] sm:$0xf]
    %s415 = scalar_lea.vmem %s2, 3
    %v416 = vld [vmem:[%s415] sm:$0x1]
    %v418 = vlaneseq
    %v419 = vshrl.u32 %v418, 7
    %v420 = vsub.s32 0, %v419
    %v421 = vrot.slane %v416, %v420
    %v439 = vunpack.c.l.b16 %v399
    %v440 = vunpack.c.l.b16 %v400
    %v441 = vunpack.c.l.b16 %v401
    %v442 = vunpack.c.l.b16 %v402
    %v443 = vunpack.c.l.b16 %v403
    %v444 = vunpack.c.l.b16 %v404
    %v445 = vunpack.c.l.b16 %v405
    %v446 = vunpack.c.l.b16 %v406
    %v447 = vunpack.c.l.b16 %v407
    %v448 = vunpack.c.l.b16 %v408
    %v449 = vunpack.c.l.b16 %v409
    %v450 = vunpack.c.l.b16 %v410
    %v451 = vunpack.c.l.b16 %v411
    %v452 = vunpack.c.l.b16 %v412
    %v453 = vunpack.c.l.b16 %v413
    %v454 = vunpack.c.l.b16 %v414
    %v455 = vpack.c.b16 %v440, %v439
    %v456 = vpack.c.b16 %v442, %v441
    %v457 = vpack.c.b16 %v444, %v443
    %v458 = vpack.c.b16 %v446, %v445
    %v459 = vpack.c.b16 %v448, %v447
    %v460 = vpack.c.b16 %v450, %v449
    %v461 = vpack.c.b16 %v452, %v451
    %v462 = vpack.c.b16 %v454, %v453
    %471 = vmatprep.subr.bf16.mxu0 0
    %472 = vmatpush1.bf16.msra.mxu0 %v455
    %473 = vmatprep.subr.bf16.mxu0 0
    %474 = vmatpush1.bf16.msra.mxu0 %v456
    %475 = vmatprep.subr.bf16.mxu0 0
    %476 = vmatpush1.bf16.msra.mxu0 %v457
    %477 = vmatprep.subr.bf16.mxu0 0
    %478 = vmatpush1.bf16.msra.mxu0 %v458
    %479 = vmatprep.subr.bf16.mxu0 0
    %480 = vmatpush1.bf16.msra.mxu0 %v459
    %481 = vmatprep.subr.bf16.mxu0 0
    %482 = vmatpush1.bf16.msra.mxu0 %v460
    %483 = vmatprep.subr.bf16.mxu0 0
    %484 = vmatpush1.bf16.msra.mxu0 %v461
    %485 = vmatprep.subr.bf16.mxu0 0
    %486 = vmatpush1.bf16.msra.mxu0 %v462
    %487 = vmatprep.subr.bf16.mxu0 0
    %488 = vmatpush1.bf16.msra.mxu0 0
    %489 = vmatprep.subr.bf16.mxu0 0
    %490 = vmatpush1.bf16.msra.mxu0 0
    %491 = vmatprep.subr.bf16.mxu0 0
    %492 = vmatpush1.bf16.msra.mxu0 0
    %493 = vmatprep.subr.bf16.mxu0 0
    %494 = vmatpush1.bf16.msra.mxu0 0
    %495 = vmatprep.subr.bf16.mxu0 0
    %496 = vmatpush1.bf16.msra.mxu0 0
    %497 = vmatprep.subr.bf16.mxu0 0
    %498 = vmatpush1.bf16.msra.mxu0 0
    %499 = vmatprep.subr.bf16.mxu0 0
    %500 = vmatpush1.bf16.msra.mxu0 0
    %501 = vmatprep.subr.bf16.mxu0 0
    %502 = vmatpush1.bf16.msra.mxu0 0
    %503 = vmatprep.mubr.bf16.mxu0 0
    %504 = vmatmul.mubr.bf16.gmra.mrb[0].mxu0 %v397
    %v505 = vpop.f32.mrb[0].mxu0
    %v506 = vadd.f32 %v421, %v505
    %v507 = vpop.f32.mrb[0].mxu0
    %v508 = vpop.f32.mrb[0].mxu0
    %v509 = vpop.f32.mrb[0].mxu0
    %510 = vdwg.mxu0
    %v511 = vtanh.pop %v506
    %512 = vst [vmem:[#allocation7] sm:$0xff] %v511
    %v513 = vpack.c.bf16 %v511, %v511
    %v514 = vld [vmem:[#allocation5] sm:$0xf]
    %v515 = vld [vmem:[#allocation5 + $0x4] sm:$0xf]
    %v516 = vld [vmem:[#allocation5 + $0x8] sm:$0xf]
    %v517 = vld [vmem:[#allocation5 + $0xc] sm:$0xf]
    %v518 = vld [vmem:[#allocation5 + $0x10] sm:$0xf]
    %v519 = vld [vmem:[#allocation5 + $0x14] sm:$0xf]
    %v520 = vld [vmem:[#allocation5 + $0x18] sm:$0xf]
    %v521 = vld [vmem:[#allocation5 + $0x1c] sm:$0xf]
    %v522 = vld [vmem:[#allocation5 + $0x20] sm:$0xf]
    %v523 = vld [vmem:[#allocation5 + $0x24] sm:$0xf]
    %v524 = vld [vmem:[#allocation5 + $0x28] sm:$0xf]
    %v525 = vld [vmem:[#allocation5 + $0x2c] sm:$0xf]
    %v526 = vld [vmem:[#allocation5 + $0x30] sm:$0xf]
    %v527 = vld [vmem:[#allocation5 + $0x34] sm:$0xf]
    %v528 = vld [vmem:[#allocation5 + $0x38] sm:$0xf]
    %v529 = vld [vmem:[#allocation5 + $0x3c] sm:$0xf]
    %v530 = vld [vmem:[%s4] sm:$0x1]
    %v532 = vlaneseq
    %v533 = vshrl.u32 %v532, 7
    %v534 = vsub.s32 0, %v533
    %v535 = vrot.slane %v530, %v534
    %v553 = vunpack.c.l.b16 %v514
    %v554 = vunpack.c.l.b16 %v515
    %v555 = vunpack.c.l.b16 %v516
    %v556 = vunpack.c.l.b16 %v517
    %v557 = vunpack.c.l.b16 %v518
    %v558 = vunpack.c.l.b16 %v519
    %v559 = vunpack.c.l.b16 %v520
    %v560 = vunpack.c.l.b16 %v521
    %v561 = vunpack.c.l.b16 %v522
    %v562 = vunpack.c.l.b16 %v523
    %v563 = vunpack.c.l.b16 %v524
    %v564 = vunpack.c.l.b16 %v525
    %v565 = vunpack.c.l.b16 %v526
    %v566 = vunpack.c.l.b16 %v527
    %v567 = vunpack.c.l.b16 %v528
    %v568 = vunpack.c.l.b16 %v529
    %v569 = vpack.c.b16 %v554, %v553
    %v570 = vpack.c.b16 %v556, %v555
    %v571 = vpack.c.b16 %v558, %v557
    %v572 = vpack.c.b16 %v560, %v559
    %v573 = vpack.c.b16 %v562, %v561
    %v574 = vpack.c.b16 %v564, %v563
    %v575 = vpack.c.b16 %v566, %v565
    %v576 = vpack.c.b16 %v568, %v567
    %585 = vmatprep.subr.bf16.mxu0 0
    %586 = vmatpush1.bf16.msra.mxu0 %v569
    %587 = vmatprep.subr.bf16.mxu0 0
    %588 = vmatpush1.bf16.msra.mxu0 %v570
    %589 = vmatprep.subr.bf16.mxu0 0
    %590 = vmatpush1.bf16.msra.mxu0 %v571
    %591 = vmatprep.subr.bf16.mxu0 0
    %592 = vmatpush1.bf16.msra.mxu0 %v572
    %593 = vmatprep.subr.bf16.mxu0 0
    %594 = vmatpush1.bf16.msra.mxu0 %v573
    %595 = vmatprep.subr.bf16.mxu0 0
    %596 = vmatpush1.bf16.msra.mxu0 %v574
    %597 = vmatprep.subr.bf16.mxu0 0
    %598 = vmatpush1.bf16.msra.mxu0 %v575
    %599 = vmatprep.subr.bf16.mxu0 0
    %600 = vmatpush1.bf16.msra.mxu0 %v576
    %601 = vmatprep.subr.bf16.mxu0 0
    %602 = vmatpush1.bf16.msra.mxu0 0
    %603 = vmatprep.subr.bf16.mxu0 0
    %604 = vmatpush1.bf16.msra.mxu0 0
    %605 = vmatprep.subr.bf16.mxu0 0
    %606 = vmatpush1.bf16.msra.mxu0 0
    %607 = vmatprep.subr.bf16.mxu0 0
    %608 = vmatpush1.bf16.msra.mxu0 0
    %609 = vmatprep.subr.bf16.mxu0 0
    %610 = vmatpush1.bf16.msra.mxu0 0
    %611 = vmatprep.subr.bf16.mxu0 0
    %612 = vmatpush1.bf16.msra.mxu0 0
    %613 = vmatprep.subr.bf16.mxu0 0
    %614 = vmatpush1.bf16.msra.mxu0 0
    %615 = vmatprep.subr.bf16.mxu0 0
    %616 = vmatpush1.bf16.msra.mxu0 0
    %617 = vmatprep.mubr.bf16.mxu0 0
    %618 = vmatmul.mubr.bf16.gmra.mrb[0].mxu0 %v513
    %v619 = vpop.f32.mrb[0].mxu0
    %v620 = vadd.f32 %v535, %v619
    %v621 = vpop.f32.mrb[0].mxu0
    %v622 = vpop.f32.mrb[0].mxu0
    %v623 = vpop.f32.mrb[0].mxu0
    %624 = vdwg.mxu0
    %625 = vmax.xlane.f32.xlu0 %v620
    %v626 = vpop.xlane.xlu0 %625
    %v627 = vsub.f32 %v620, %v626
    %v628 = vmul.f32 %v627, 1.442695
    %v629 = vpow.pop %v628
    %630 = vadd.xlane.f32.xlu0 %v629
    %v631 = vpop.xlane.xlu0 %630
    %v632 = vrcp.pop %v631
    %v633 = vmul.f32 %v629, %v632
    %634 = vst [vmem:[#allocation8] sm:$0xff] %v633
    // Predicated region
    $region30: #{decoder_forward.1} parent=1 // pred_check
      _
    $region31: #{decoder_forward.1} parent=1 // pred_check_branch
      %636 = sbr.rel (0) target = $region33
    $region32: #{decoder_forward.1} parent=1 // pred_region
      %s638 = ssub.s32 128, 128
      %639 = vsyncadd [#allocation4], %s638
      %s641 = sshll.u32 [#allocation7], 4
      %s642 = int_to_ptr.vmem [resolvable:$true] %s641
      %644 = dma.vmem_to_hbm [thread:$0]  %s642, 128, %s5, [#allocation4]
    $region33: #{decoder_forward.1} parent=1 // pred_fallthru
      _
    // Predicated region
    $region34: #{decoder_forward.1} parent=1 // pred_check
      _
    $region35: #{decoder_forward.1} parent=1 // pred_check_branch
      %646 = sbr.rel (0) target = $region37
    $region36: #{decoder_forward.1} parent=1 // pred_region
      %s648 = ssub.s32 128, 128
      %649 = vsyncadd [#allocation9], %s648
      %s651 = sshll.u32 [#allocation8], 4
      %s652 = int_to_ptr.vmem [resolvable:$true] %s651
      %654 = dma.vmem_to_hbm [thread:$0]  %s652, 128, %s6, [#allocation9]
    $region37: #{decoder_forward.1} parent=1 // pred_fallthru
      _
    // Predicated region
    $region38: #{decoder_forward.1} parent=1 // pred_check
      _
    $region39: #{decoder_forward.1} parent=1 // pred_check_branch
      %656 = sbr.rel (0) target = $region41
    $region40: #{decoder_forward.1} parent=1 // pred_region
      %657 = dma.done [#allocation4], 128
    $region41: #{decoder_forward.1} parent=1 // pred_fallthru
      _
    // Predicated region
    $region42: #{decoder_forward.1} parent=1 // pred_check
      _
    $region43: #{decoder_forward.1} parent=1 // pred_check_branch
      %659 = sbr.rel (0) target = $region45
    $region44: #{decoder_forward.1} parent=1 // pred_region
      %660 = dma.done [#allocation9], 128
    $region45: #{decoder_forward.1} parent=1 // pred_fallthru
      _
    %661 = vsyncpa [#allocation3], 1
    %662 = vsyncpa [#allocation6], 1
    %663 = vsyncpa [#allocation4], 1
    %664 = vsyncpa [#allocation9], 1

</llo_original>
